<compile_context>
chip_gen: v5e
topology: v5e:2x2
jax: 0.10.0
libtpu: 0.0.40
codegen_flags: <defaults>
</compile_context>

<pallas_src>
import functools

import jax
import jax.numpy as jnp
import numpy as np
from jax import lax
from jax.experimental import pallas as pl
from jax.experimental.pallas import tpu as pltpu

BN_EPS = 1e-5
_TM_CAP = 512          # max M (rows) per tile
_TN_CAP = 512          # max N (output channels) per tile


def _vmem_limit_bytes():
    # Derive the scoped-VMEM budget from the hardware when possible (v7x has
    # only 64 MiB physical per core); fall back to a limit safe everywhere.
    try:
        cap = int(pltpu.get_tpu_info().vmem_capacity_bytes)
    except Exception:
        cap = 64 * 1024 * 1024
    return min(48 * 1024 * 1024, (3 * cap) // 4)


_VMEM_LIMIT = _vmem_limit_bytes()


def _pick_m_tile(m, cap=_TM_CAP):
    """Return (tm, padded_m): the largest multiple-of-8 tile <= cap that divides
    m exactly; otherwise pad m up to a multiple of `cap` (padded rows are masked
    out of the BN statistics and sliced off the output)."""
    if m <= cap:
        return m, m
    t = cap - cap % 8
    while t >= 8:
        if m % t == 0:
            return t, m
        t -= 8
    mp = ((m + cap - 1) // cap) * cap
    return cap, mp


# ----------------------------- Pallas kernels ------------------------------ #

def _fused_conv_bn_kernel(*refs, m_rows, apply_relu, has_residual):
    """Single-pass conv (full-K MXU matmul) + train-mode BN + residual + ReLU.

    Used whenever the whole M = B*Ho*Wo dimension fits in one tile, so the
    per-channel batch statistics are complete inside the kernel and the f32
    conv intermediate never goes to HBM."""
    if has_residual:
        p_ref, w_ref, g_ref, b_ref, r_ref, o_ref = refs
    else:
        p_ref, w_ref, g_ref, b_ref, o_ref = refs
        r_ref = None
    acc = jnp.dot(p_ref[...], w_ref[...], preferred_element_type=jnp.float32)
    inv_m = 1.0 / float(m_rows)
    mean = jnp.sum(acc, axis=0, keepdims=True) * inv_m
    d = acc - mean
    var = jnp.sum(d * d, axis=0, keepdims=True) * inv_m        # biased (BN train)
    y = d * (g_ref[...] * lax.rsqrt(var + BN_EPS)) + b_ref[...]
    if r_ref is not None:
        y = y + r_ref[...].astype(jnp.float32)
    if apply_relu:
        y = jnp.maximum(y, 0.0)
    o_ref[...] = y.astype(o_ref.dtype)


def _matmul_stats_kernel(p_ref, w_ref, o_ref, sum_ref, m2_ref, *,
                         m_rows, tm, masked):
    """Full-K MXU matmul tile + numerically stable per-tile BN partials.

    Emits per (M-tile, N-tile): the f32 conv block, the per-column sum and the
    per-column sum of squares centered on the *tile* mean, so the global
    mean/variance can be merged exactly (Chan et al.) without the catastrophic
    E[x^2] - E[x]^2 cancellation."""
    i = pl.program_id(1)                        # M-tile index (inner grid axis)
    acc = jnp.dot(p_ref[...], w_ref[...], preferred_element_type=jnp.float32)
    o_ref[...] = acc
    if masked:                                  # only the last M tile is ragged
        row = lax.broadcasted_iota(jnp.int32, (tm, 1), 0) + i * tm
        valid = row < m_rows
        cnt = jnp.sum(valid.astype(jnp.float32), axis=0, keepdims=True)  # (1,1)
        s = jnp.sum(jnp.where(valid, acc, 0.0), axis=0, keepdims=True)
        mu = s / jnp.maximum(cnt, 1.0)
        d = jnp.where(valid, acc - mu, 0.0)
    else:
        s = jnp.sum(acc, axis=0, keepdims=True)
        d = acc - s * (1.0 / float(tm))
    sum_ref[...] = s[None]
    m2_ref[...] = jnp.sum(d * d, axis=0, keepdims=True)[None]


def _bn_apply_kernel(*refs, has_residual, apply_relu):
    """Fused y = conv*scale + bias (+ residual) (+ ReLU); bf16 output."""
    if has_residual:
        x_ref, s_ref, b_ref, r_ref, o_ref = refs
    else:
        x_ref, s_ref, b_ref, o_ref = refs
        r_ref = None
    y = x_ref[...] * s_ref[...] + b_ref[...]
    if r_ref is not None:
        y = y + r_ref[...].astype(jnp.float32)
    if apply_relu:
        y = jnp.maximum(y, 0.0)
    o_ref[...] = y.astype(o_ref.dtype)


def _maxpool_dense_kernel(x_ref, o_ref):
    """Separable dense (stride-1) 3x3 max over a padded (1, H+2, W+2, C) tile."""
    H, W = o_ref.shape[1], o_ref.shape[2]
    x = x_ref[0]
    rows = jnp.maximum(jnp.maximum(x[0:H], x[1:H + 1]), x[2:H + 2])
    o_ref[0] = jnp.maximum(jnp.maximum(rows[:, 0:W], rows[:, 1:W + 1]),
                           rows[:, 2:W + 2])


# ------------------------------ JAX wrappers -------------------------------- #

def _im2col(x_nhwc, kh, kw, stride, padding):
    """Extract conv patches -> (B*Ho*Wo, kh*kw*C); flat k = (dy*kw+dx)*C + c."""
    B, H, W, C = x_nhwc.shape
    xp = jnp.pad(x_nhwc, ((0, 0), (padding, padding), (padding, padding), (0, 0)))
    Ho = (H + 2 * padding - kh) // stride + 1
    Wo = (W + 2 * padding - kw) // stride + 1
    cols = []
    for dy in range(kh):
        for dx in range(kw):
            cols.append(xp[:, dy:dy + stride * (Ho - 1) + 1:stride,
                           dx:dx + stride * (Wo - 1) + 1:stride, :])
    p = jnp.stack(cols, axis=3)                         # (B, Ho, Wo, kh*kw, C)
    return p.reshape(B * Ho * Wo, kh * kw * C), (B, Ho, Wo)


def _fused_conv_bn(patches, w2d, g, b, res, relu):
    M, K = patches.shape
    N = w2d.shape[1]
    tn = N // 2 if N >= 256 else N      # >=2 parallel N blocks feeds both v7x TCs
    gn = N // tn
    in_specs = [pl.BlockSpec((M, K), lambda j: (0, 0)),
                pl.BlockSpec((K, tn), lambda j: (0, j)),
                pl.BlockSpec((1, tn), lambda j: (0, j)),
                pl.BlockSpec((1, tn), lambda j: (0, j))]
    args = [patches, w2d, g, b]
    if res is not None:
        in_specs.append(pl.BlockSpec((M, tn), lambda j: (0, j)))
        args.append(res)
    return pl.pallas_call(
        functools.partial(_fused_conv_bn_kernel, m_rows=M, apply_relu=relu,
                          has_residual=res is not None),
        grid_spec=pltpu.PrefetchScalarGridSpec(
            num_scalar_prefetch=0, grid=(gn,),
            in_specs=in_specs,
            out_specs=pl.BlockSpec((M, tn), lambda j: (0, j))),
        out_shape=jax.ShapeDtypeStruct((M, N), jnp.bfloat16),
        compiler_params=pltpu.CompilerParams(
            dimension_semantics=("parallel",),
            vmem_limit_bytes=_VMEM_LIMIT),
        cost_estimate=pl.CostEstimate(
            flops=2 * M * K * N, transcendentals=N,
            bytes_accessed=2 * (M * K + K * N + M * N)),
    )(*args)


def _two_pass_conv_bn(patches, w2d, g, b, res, relu):
    M, K = patches.shape
    N = w2d.shape[1]
    tm, Mp = _pick_m_tile(M)
    masked = Mp != M
    if masked:
        patches = jnp.pad(patches, ((0, Mp - M), (0, 0)))
        if res is not None:
            res = jnp.pad(res, ((0, Mp - M), (0, 0)))
    gm = Mp // tm
    tn = min(N, _TN_CAP)
    gn = N // tn

    # Pass 1: full-K MXU matmul; N-outer / M-inner grid keeps the (K, tn)
    # weight block VMEM-resident across the whole M sweep.  Also emits stable
    # per-tile BN partials from the f32 accumulator.
    conv, part_sum, part_m2 = pl.pallas_call(
        functools.partial(_matmul_stats_kernel, m_rows=M, tm=tm, masked=masked),
        grid_spec=pltpu.PrefetchScalarGridSpec(
            num_scalar_prefetch=0, grid=(gn, gm),
            in_specs=[pl.BlockSpec((tm, K), lambda j, i: (i, 0)),
                      pl.BlockSpec((K, tn), lambda j, i: (0, j))],
            out_specs=(pl.BlockSpec((tm, tn), lambda j, i: (i, j)),
                       pl.BlockSpec((1, 1, tn), lambda j, i: (i, 0, j)),
                       pl.BlockSpec((1, 1, tn), lambda j, i: (i, 0, j)))),
        out_shape=(jax.ShapeDtypeStruct((Mp, N), jnp.float32),
                   jax.ShapeDtypeStruct((gm, 1, N), jnp.float32),
                   jax.ShapeDtypeStruct((gm, 1, N), jnp.float32)),
        compiler_params=pltpu.CompilerParams(
            dimension_semantics=("parallel", "parallel"),
            vmem_limit_bytes=_VMEM_LIMIT),
        cost_estimate=pl.CostEstimate(
            flops=2 * Mp * K * N, transcendentals=0,
            bytes_accessed=2 * Mp * K + 2 * gm * K * N + 4 * Mp * N),
    )(patches, w2d)

    # Exact Chan-style merge of per-tile statistics (tiny (gm,1,N) XLA work).
    counts = jnp.asarray(
        np.minimum(tm, M - tm * np.arange(gm)).astype(np.float32)
    ).reshape(gm, 1, 1)
    tile_mean = part_sum / counts
    mean = jnp.sum(part_sum, axis=0) / M                                # (1, N)
    m2 = jnp.sum(part_m2 + counts * jnp.square(tile_mean - mean[None]), axis=0)
    var = jnp.maximum(m2 / M, 0.0)                                      # (1, N)
    scale = g * lax.rsqrt(var + BN_EPS)
    bias = b - mean * scale

    # Pass 2: fused scale/bias (+ residual) (+ ReLU), bf16 activations out.
    args = [conv, scale, bias]
    in_specs = [pl.BlockSpec((tm, tn), lambda i, j: (i, j)),
                pl.BlockSpec((1, tn), lambda i, j: (0, j)),
                pl.BlockSpec((1, tn), lambda i, j: (0, j))]
    if res is not None:
        args.append(res)
        in_specs.append(pl.BlockSpec((tm, tn), lambda i, j: (i, j)))
    out = pl.pallas_call(
        functools.partial(_bn_apply_kernel, has_residual=res is not None,
                          apply_relu=relu),
        grid_spec=pltpu.PrefetchScalarGridSpec(
            num_scalar_prefetch=0, grid=(gm, gn),
            in_specs=in_specs,
            out_specs=pl.BlockSpec((tm, tn), lambda i, j: (i, j))),
        out_shape=jax.ShapeDtypeStruct((Mp, N), jnp.bfloat16),
        compiler_params=pltpu.CompilerParams(
            dimension_semantics=("parallel", "parallel"),
            vmem_limit_bytes=_VMEM_LIMIT),
    )(*args)
    return out[:M] if masked else out


def pallas_conv_bn(x_nhwc, w_oihw, gamma, beta, *, stride, padding, relu,
                   residual=None):
    """conv (full-K im2col matmul on the MXU) + train-mode BN + residual + ReLU.

    TODO(synk): im2col is still materialized by XLA in HBM; an in-kernel halo
    gather (shifted-matmul accumulation over the padded NHWC activation) would
    remove the kh*kw read amplification."""
    cout, cin, kh, kw = w_oihw.shape
    patches, (B, Ho, Wo) = _im2col(x_nhwc.astype(jnp.bfloat16),
                                   kh, kw, stride, padding)
    M, K = patches.shape
    w2d = jnp.transpose(w_oihw, (2, 3, 1, 0)).reshape(K, cout).astype(jnp.bfloat16)
    g = gamma.astype(jnp.float32).reshape(1, cout)
    b = beta.astype(jnp.float32).reshape(1, cout)
    res = None
    if residual is not None:
        res = residual.astype(jnp.bfloat16).reshape(M, cout)

    if M <= _TM_CAP:
        out = _fused_conv_bn(patches, w2d, g, b, res, relu)
    else:
        out = _two_pass_conv_bn(patches, w2d, g, b, res, relu)
    return out.reshape(B, Ho, Wo, cout)


def pallas_maxpool_3x3_s2(x_nhwc):
    """3x3 / stride-2 / pad-1 max pool: separable dense 3x3 max in-kernel."""
    B, H, W, C = x_nhwc.shape
    xp = jnp.pad(x_nhwc, ((0, 0), (1, 1), (1, 1), (0, 0)),
                 constant_values=-jnp.inf)
    dense = pl.pallas_call(
        _maxpool_dense_kernel,
        grid_spec=pltpu.PrefetchScalarGridSpec(
            num_scalar_prefetch=0, grid=(B,),
            in_specs=[pl.BlockSpec((1, H + 2, W + 2, C), lambda b: (b, 0, 0, 0))],
            out_specs=pl.BlockSpec((1, H, W, C), lambda b: (b, 0, 0, 0))),
        out_shape=jax.ShapeDtypeStruct((B, H, W, C), x_nhwc.dtype),
        compiler_params=pltpu.CompilerParams(
            dimension_semantics=("parallel",),
            vmem_limit_bytes=_VMEM_LIMIT),
    )(xp)
    return dense[:, ::2, ::2, :]


# --------------------------- Pure-JAX references ---------------------------- #

def _ref_conv_bn_lax(x_nhwc, w_oihw, gamma, beta, *, stride, padding, relu,
                     residual=None):
    """Independent reference (lax.conv + train-mode BN, f32 statistics)."""
    y = lax.conv_general_dilated(
        x_nhwc.astype(jnp.bfloat16),
        jnp.transpose(w_oihw, (2, 3, 1, 0)).astype(jnp.bfloat16),
        window_strides=(stride, stride),
        padding=[(padding, padding), (padding, padding)],
        dimension_numbers=('NHWC', 'HWIO', 'NHWC'),
        preferred_element_type=jnp.float32)
    mean = jnp.mean(y, axis=(0, 1, 2), keepdims=True)
    var = jnp.mean(jnp.square(y - mean), axis=(0, 1, 2), keepdims=True)
    y = (y - mean) * lax.rsqrt(var + BN_EPS) * gamma + beta
    if residual is not None:
        y = y + residual.astype(jnp.float32)
    if relu:
        y = jnp.maximum(y, 0.0)
    return y.astype(jnp.bfloat16)


def _ref_conv_bn_matmul(x_nhwc, w_oihw, gamma, beta, *, stride, padding, relu,
                        residual=None):
    """Pure-JAX reference mirroring the kernel's math (im2col matmul, f32
    statistics), so the end-to-end check is not dominated by bf16 rounding
    chaos that train-mode BatchNorm re-amplifies at every layer."""
    cout, cin, kh, kw = w_oihw.shape
    patches, (B, Ho, Wo) = _im2col(x_nhwc.astype(jnp.bfloat16),
                                   kh, kw, stride, padding)
    w2d = jnp.transpose(w_oihw, (2, 3, 1, 0)).reshape(kh * kw * cin, cout)
    y = jnp.dot(patches, w2d.astype(jnp.bfloat16),
                preferred_element_type=jnp.float32)
    mean = jnp.mean(y, axis=0, keepdims=True)
    var = jnp.mean(jnp.square(y - mean), axis=0, keepdims=True)
    y = ((y - mean) * lax.rsqrt(var + BN_EPS) * gamma.reshape(1, cout)
         + beta.reshape(1, cout))
    if residual is not None:
        y = y + residual.reshape(y.shape).astype(jnp.float32)
    if relu:
        y = jnp.maximum(y, 0.0)
    return y.astype(jnp.bfloat16).reshape(B, Ho, Wo, cout)


def _ref_maxpool_3x3_s2(x_nhwc):
    B, H, W, C = x_nhwc.shape
    xp = jnp.pad(x_nhwc, ((0, 0), (1, 1), (1, 1), (0, 0)),
                 constant_values=-jnp.inf)
    Ho = (H + 2 - 3) // 2 + 1
    Wo = (W + 2 - 3) // 2 + 1
    r = None
    for dy in range(3):
        for dx in range(3):
            win = xp[:, dy:dy + 2 * (Ho - 1) + 1:2,
                     dx:dx + 2 * (Wo - 1) + 1:2, :]
            r = win if r is None else jnp.maximum(r, win)
    return r


# ------------------------------ ResNet model -------------------------------- #

def make_config(num_blocks):
    """Static per-block config: (in_planes, planes, stride, has_shortcut)."""
    cfg = []
    in_planes = 64
    for planes, stride0, nb in zip((64, 128, 256, 512), (1, 2, 2, 2), num_blocks):
        layer = []
        for bi in range(nb):
            stride = stride0 if bi == 0 else 1
            has_sc = stride != 1 or in_planes != planes
            layer.append((in_planes, planes, stride, has_sc))
            in_planes = planes
        cfg.append(tuple(layer))
    return tuple(cfg)


def init_params(key, config):
    keys = iter(jax.random.split(key, 1024))

    def conv_w(cout, cin, k):
        fan_in = cin * k * k
        return (jax.random.normal(next(keys), (cout, cin, k, k), jnp.float32)
                * np.sqrt(2.0 / fan_in)).astype(jnp.float32)

    def bn(c):
        g = 1.0 + 0.1 * jax.random.normal(next(keys), (c,), jnp.float32)
        b = 0.05 * jax.random.normal(next(keys), (c,), jnp.float32)
        return g, b

    params = {'conv1_w': conv_w(64, 3, 7)}
    params['bn1_g'], params['bn1_b'] = bn(64)
    layers = []
    for layer_cfg in config:
        layer = []
        for (cin, planes, _stride, has_sc) in layer_cfg:
            blk = {'conv1_w': conv_w(planes, cin, 3)}
            blk['bn1_g'], blk['bn1_b'] = bn(planes)
            blk['conv2_w'] = conv_w(planes, planes, 3)
            blk['bn2_g'], blk['bn2_b'] = bn(planes)
            if has_sc:
                blk['sc_w'] = conv_w(planes, cin, 1)
                blk['sc_g'], blk['sc_b'] = bn(planes)
            layer.append(blk)
        layers.append(layer)
    params['layers'] = layers
    return params


def resnet_forward(x_nchw, params, config, conv_bn_fn, maxpool_fn):
    # TODO(synk): nn.BatchNorm2d's running-stat buffer updates (in-place module
    # state mutation) are not reproduced; only the train-mode forward math is.
    x = jnp.transpose(x_nchw, (0, 2, 3, 1))             # NCHW -> NHWC
    x = conv_bn_fn(x, params['conv1_w'], params['bn1_g'], params['bn1_b'],
                   stride=2, padding=3, relu=True)
    x = maxpool_fn(x)
    for layer_params, layer_cfg in zip(params['layers'], config):
        for blk, (_, _, stride, has_sc) in zip(layer_params, layer_cfg):
            out = conv_bn_fn(x, blk['conv1_w'], blk['bn1_g'], blk['bn1_b'],
                             stride=stride, padding=1, relu=True)
            if has_sc:
                sc = conv_bn_fn(x, blk['sc_w'], blk['sc_g'], blk['sc_b'],
                                stride=stride, padding=0, relu=False)
            else:
                sc = x
            x = conv_bn_fn(out, blk['conv2_w'], blk['bn2_g'], blk['bn2_b'],
                           stride=1, padding=1, relu=True, residual=sc)
    return jnp.transpose(x, (0, 3, 1, 2)).astype(jnp.float32)   # NHWC -> NCHW


@functools.partial(jax.jit, static_argnames=('config',))
def resnet_pallas(x, params, config):
    return resnet_forward(x, params, config, pallas_conv_bn, pallas_maxpool_3x3_s2)


@functools.partial(jax.jit, static_argnames=('config',))
def resnet_reference(x, params, config):
    return resnet_forward(x, params, config, _ref_conv_bn_matmul, _ref_maxpool_3x3_s2)


# -------------------------- single-layer unit checks ------------------------ #

def run_unit_checks(key):
    """Validate each conv/BN kernel path against an independent lax.conv ref."""
    ks = jax.random.split(key, 16)

    def bn_params(k, c):
        k1, k2 = jax.random.split(k)
        return (1.0 + 0.1 * jax.random.normal(k1, (c,), jnp.float32),
                0.05 * jax.random.normal(k2, (c,), jnp.float32))

    def check(x, w, g, b, *, stride, padding, relu, residual=None, tol=2e-2):
        out = pallas_conv_bn(x, w, g, b, stride=stride, padding=padding,
                             relu=relu, residual=residual)
        ref = _ref_conv_bn_lax(x, w, g, b, stride=stride, padding=padding,
                               relu=relu, residual=residual)
        np.testing.assert_allclose(np.asarray(out.astype(jnp.float32)),
                                   np.asarray(ref.astype(jnp.float32)),
                                   rtol=tol, atol=tol)

    # 1) fused single-tile path: 7x7 / stride-2 / pad-3 (conv1-style).
    x = jax.random.normal(ks[0], (2, 16, 16, 3), jnp.float32)
    w = jax.random.normal(ks[1], (64, 3, 7, 7), jnp.float32) * 0.15
    g, b = bn_params(ks[2], 64)
    check(x, w, g, b, stride=2, padding=3, relu=True)

    # 2) two-pass tiled path (gm > 1) with residual: 3x3 / stride-1 / pad-1.
    x = jax.random.normal(ks[3], (2, 24, 24, 16), jnp.float32)     # M = 1152
    w = jax.random.normal(ks[4], (64, 16, 3, 3), jnp.float32) * 0.1
    g, b = bn_params(ks[5], 64)
    res = jax.random.normal(ks[6], (2, 24, 24, 64), jnp.float32).astype(jnp.bfloat16)
    check(x, w, g, b, stride=1, padding=1, relu=True, residual=res)

    # 3) ragged-M path (padded + masked last tile): M = 529.
    x = jax.random.normal(ks[7], (1, 23, 23, 8), jnp.float32)
    w = jax.random.normal(ks[8], (64, 8, 3, 3), jnp.float32) * 0.1
    g, b = bn_params(ks[9], 64)
    check(x, w, g, b, stride=1, padding=1, relu=False)

    # 4) 3x3 / stride-2 (layer-transition conv).
    x = jax.random.normal(ks[10], (2, 16, 16, 32), jnp.float32)
    w = jax.random.normal(ks[11], (64, 32, 3, 3), jnp.float32) * 0.1
    g, b = bn_params(ks[12], 64)
    check(x, w, g, b, stride=2, padding=1, relu=True)

    # 5) 1x1 / stride-2 (shortcut conv, no ReLU).
    w = jax.random.normal(ks[13], (64, 32, 1, 1), jnp.float32) * 0.2
    g, b = bn_params(ks[14], 64)
    check(x, w, g, b, stride=2, padding=0, relu=False)


# ---------------------------------- main ------------------------------------ #

if __name__ == "__main__":
    key = jax.random.PRNGKey(0)
    pkey, xkey, ukey = jax.random.split(key, 3)

    # Per-path kernel validation against an independent lax.conv reference.
    run_unit_checks(ukey)

    # Full ResNet forward (small synthetic config, same semantics as [2,2,2,2]).
    num_blocks = (1, 1, 1, 1)
    config = make_config(num_blocks)
    params = init_params(pkey, config)
    x = jax.random.normal(xkey, (2, 3, 64, 64), jnp.float32)    # NCHW, like PyTorch

    out = jax.block_until_ready(resnet_pallas(x, params, config))
    assert out.shape == (2, 512, 2, 2), out.shape
    assert bool(jnp.all(jnp.isfinite(out)))

    ref = jax.block_until_ready(resnet_reference(x, params, config))
    np.testing.assert_allclose(np.asarray(out), np.asarray(ref),
                               rtol=2e-2, atol=2e-2)
    print("KERNEL_OK")
</pallas_src>

<mosaic_0001>
module attributes {stable_mosaic.version = 11 : i64} {
  func.func @_fused_conv_bn_kernel(%arg0: i32, %arg1: memref<128x147xbf16, #tpu.memory_space<vmem>>, %arg2: memref<147x64xbf16, #tpu.memory_space<vmem>>, %arg3: memref<1x64xf32, #tpu.memory_space<vmem>>, %arg4: memref<1x64xf32, #tpu.memory_space<vmem>>, %arg5: memref<128x64xbf16, #tpu.memory_space<vmem>>) attributes {dimension_semantics = [#tpu.dimension_semantics<parallel>], iteration_bounds = array<i64: 1>, scalar_prefetch = 0 : i64, scratch_operands = 0 : i64, tpu.core_type = #tpu.core_type<tc>, window_params = [{pipeline_mode = #tpu.pipeline_mode<synchronous>, transform_indices = @transform_0, window_bounds = array<i64: 128, 147>}, {transform_indices = @transform_1, window_bounds = array<i64: 147, 64>}, {transform_indices = @transform_2, window_bounds = array<i64: 1, 64>}, {transform_indices = @transform_3, window_bounds = array<i64: 1, 64>}, {transform_indices = @transform_4, window_bounds = array<i64: 128, 64>}]} {
    %c0 = arith.constant 0 : index
    %c0_0 = arith.constant 0 : index
    %0 = vector.load %arg1[%c0, %c0_0] : memref<128x147xbf16, #tpu.memory_space<vmem>>, vector<128x147xbf16>
    %c0_1 = arith.constant 0 : index
    %c0_2 = arith.constant 0 : index
    %1 = vector.load %arg2[%c0_1, %c0_2] : memref<147x64xbf16, #tpu.memory_space<vmem>>, vector<147x64xbf16>
    %cst = arith.constant dense<0.000000e+00> : vector<128x64xf32>
    %2 = tpu.matmul %0, %1, %cst {dimension_numbers = #tpu.dot_dimension_numbers<[1], [0], [0], [1], [0, 0, 1, 1], [], []>} : vector<128x147xbf16>, vector<147x64xbf16>, vector<128x64xf32> -> vector<128x64xf32>
    %cst_3 = arith.constant dense<0.000000e+00> : vector<64xf32>
    %3 = vector.multi_reduction <add>, %2, %cst_3 [0] : vector<128x64xf32> to vector<64xf32>
    %4 = vector.shape_cast %3 : vector<64xf32> to vector<1x64xf32>
    %cst_4 = arith.constant 7.812500e-03 : f32
    %5 = vector.broadcast %cst_4 : f32 to vector<1x64xf32>
    %6 = arith.mulf %4, %5 : vector<1x64xf32>
    %7 = vector.broadcast %6 : vector<1x64xf32> to vector<128x64xf32>
    %8 = arith.subf %2, %7 : vector<128x64xf32>
    %9 = arith.mulf %8, %8 : vector<128x64xf32>
    %cst_5 = arith.constant dense<0.000000e+00> : vector<64xf32>
    %10 = vector.multi_reduction <add>, %9, %cst_5 [0] : vector<128x64xf32> to vector<64xf32>
    %11 = vector.shape_cast %10 : vector<64xf32> to vector<1x64xf32>
    %cst_6 = arith.constant 7.812500e-03 : f32
    %12 = vector.broadcast %cst_6 : f32 to vector<1x64xf32>
    %13 = arith.mulf %11, %12 : vector<1x64xf32>
    %c0_7 = arith.constant 0 : index
    %c0_8 = arith.constant 0 : index
    %14 = vector.load %arg3[%c0_7, %c0_8] : memref<1x64xf32, #tpu.memory_space<vmem>>, vector<1x64xf32>
    %cst_9 = arith.constant 9.99999974E-6 : f32
    %15 = vector.broadcast %cst_9 : f32 to vector<1x64xf32>
    %16 = arith.addf %13, %15 : vector<1x64xf32>
    %17 = math.rsqrt %16 : vector<1x64xf32>
    %18 = arith.mulf %14, %17 : vector<1x64xf32>
    %19 = vector.broadcast %18 : vector<1x64xf32> to vector<128x64xf32>
    %20 = arith.mulf %8, %19 : vector<128x64xf32>
    %c0_10 = arith.constant 0 : index
    %c0_11 = arith.constant 0 : index
    %21 = vector.load %arg4[%c0_10, %c0_11] : memref<1x64xf32, #tpu.memory_space<vmem>>, vector<1x64xf32>
    %22 = vector.broadcast %21 : vector<1x64xf32> to vector<128x64xf32>
    %23 = arith.addf %20, %22 : vector<128x64xf32>
    %cst_12 = arith.constant 0.000000e+00 : f32
    %24 = vector.broadcast %cst_12 : f32 to vector<128x64xf32>
    %25 = arith.maximumf %23, %24 : vector<128x64xf32>
    %26 = arith.truncf %25 : vector<128x64xf32> to vector<128x64xbf16>
    %c0_13 = arith.constant 0 : index
    %c0_14 = arith.constant 0 : index
    %27 = vector.load %arg5[%c0_13, %c0_14] : memref<128x64xbf16, #tpu.memory_space<vmem>>, vector<128x64xbf16>
    tpu.vector_store %arg5[%c0_13, %c0_14], %26 {strides = array<i32>} : memref<128x64xbf16, #tpu.memory_space<vmem>>, vector<128x64xbf16>,
    return
  }
  func.func @transform_0(%arg0: i32) -> (i32, i32) {
    %c0_i32 = arith.constant 0 : i32
    %c0_i32_0 = arith.constant 0 : i32
    %c0_i32_1 = arith.constant 0 : i32
    return %c0_i32, %c0_i32_0 : i32, i32
  }
  func.func @transform_1(%arg0: i32) -> (i32, i32) {
    %c0_i32 = arith.constant 0 : i32
    %c0_i32_0 = arith.constant 0 : i32
    return %c0_i32, %arg0 : i32, i32
  }
  func.func @transform_2(%arg0: i32) -> (i32, i32) {
    %c0_i32 = arith.constant 0 : i32
    %c0_i32_0 = arith.constant 0 : i32
    return %c0_i32, %arg0 : i32, i32
  }
  func.func @transform_3(%arg0: i32) -> (i32, i32) {
    %c0_i32 = arith.constant 0 : i32
    %c0_i32_0 = arith.constant 0 : i32
    return %c0_i32, %arg0 : i32, i32
  }
  func.func @transform_4(%arg0: i32) -> (i32, i32) {
    %c0_i32 = arith.constant 0 : i32
    %c0_i32_0 = arith.constant 0 : i32
    return %c0_i32, %arg0 : i32, i32
  }
}

</mosaic_0001>

<llo_original>
// kernel: tpu_custom_call.1
$region0: #{tpu_custom_call.1}
  #allocation0 [shape = 'u32[]', space=smem, size = 0x4, offset = 0x4, fixed_abs, tag = 'smem constant byte address 0x4 - core index']
  #allocation1 [shape = 'u32[72,128]{1,0:T(1,128)}', space=vmem, size = 0x9000, scoped, tag = 'internal scratch']
  %s0 = inlined_call_operand.vmem [shape: bf16[128,147], index: 0, kind: input, shape index: {}]
  %s1 = inlined_call_operand.vmem [shape: bf16[147,64], index: 1, kind: input, shape index: {}]
  %s2 = inlined_call_operand.vmem [shape: f32[1,64], index: 2, kind: input, shape index: {}]
  %s3 = inlined_call_operand.vmem [shape: f32[1,64], index: 3, kind: input, shape index: {}]
  %s4 = inlined_call_operand.vmem [shape: bf16[128,64], index: 4, kind: output, shape index: {}]
  %s5 = sld [smem:[#allocation0]]
  $region26: #{tpu_custom_call.1} parent=0
    _
  %s7 = ssub.s32 1, %s5
  %s8 = scalar_select 0, %s7, %s5
  // Predicated region
  $region2: #{tpu_custom_call.1} parent=0 // pred_check
    _
  $region3: #{tpu_custom_call.1} parent=0 // pred_check_branch
    %10 = sbr.rel (0) target = $region5
  $region4: #{tpu_custom_call.1} parent=0 // pred_region
    _
  $region5: #{tpu_custom_call.1} parent=0 // pred_fallthru
    _
  // Predicated region
  $region6: #{tpu_custom_call.1} parent=0 // pred_check
    _
  $region7: #{tpu_custom_call.1} parent=0 // pred_check_branch
    %12 = sbr.rel (0) target = $region9
  $region8: #{tpu_custom_call.1} parent=0 // pred_region
    _
  $region9: #{tpu_custom_call.1} parent=0 // pred_fallthru
    _
  // Predicated region
  $region10: #{tpu_custom_call.1} parent=0 // pred_check
    _
  $region11: #{tpu_custom_call.1} parent=0 // pred_check_branch
    %14 = sbr.rel (0) target = $region13
  $region12: #{tpu_custom_call.1} parent=0 // pred_region
    _
  $region13: #{tpu_custom_call.1} parent=0 // pred_fallthru
    _
  // Predicated region
  $region14: #{tpu_custom_call.1} parent=0 // pred_check
    _
  $region15: #{tpu_custom_call.1} parent=0 // pred_check_branch
    %16 = sbr.rel (0) target = $region17
  $region16: #{tpu_custom_call.1} parent=0 // pred_region
    _
  $region17: #{tpu_custom_call.1} parent=0 // pred_fallthru
    _
  %v18 = vld [vmem:[%s0] sm:$0xff]
  %v19 = vld [vmem:[%s0 + $0x8] sm:$0xff]
  %v20 = vld [vmem:[%s0 + $0x10] sm:$0xff]
  %v21 = vld [vmem:[%s0 + $0x18] sm:$0xff]
  %v22 = vld [vmem:[%s0 + $0x20] sm:$0xff]
  %v23 = vld [vmem:[%s0 + $0x28] sm:$0xff]
  %v24 = vld [vmem:[%s0 + $0x30] sm:$0xff]
  %v25 = vld [vmem:[%s0 + $0x38] sm:$0xff]
  %v26 = vld [vmem:[%s0 + $0x40] sm:$0xff]
  %v27 = vld [vmem:[%s0 + $0x48] sm:$0xff]
  %v28 = vld [vmem:[%s0 + $0x50] sm:$0xff]
  %v29 = vld [vmem:[%s0 + $0x58] sm:$0xff]
  %v30 = vld [vmem:[%s0 + $0x60] sm:$0xff]
  %v31 = vld [vmem:[%s0 + $0x68] sm:$0xff]
  %v32 = vld [vmem:[%s0 + $0x70] sm:$0xff]
  %v33 = vld [vmem:[%s0 + $0x78] sm:$0xff]
  %v34 = vld [vmem:[%s1] sm:$0xf]
  %v35 = vld [vmem:[%s1 + $0x4] sm:$0xf]
  %v36 = vld [vmem:[%s1 + $0x8] sm:$0xf]
  %v37 = vld [vmem:[%s1 + $0xc] sm:$0xf]
  %v38 = vld [vmem:[%s1 + $0x10] sm:$0xf]
  %v39 = vld [vmem:[%s1 + $0x14] sm:$0xf]
  %v40 = vld [vmem:[%s1 + $0x18] sm:$0xf]
  %v41 = vld [vmem:[%s1 + $0x1c] sm:$0xf]
  %v42 = vld [vmem:[%s1 + $0x20] sm:$0xf]
  %v43 = vld [vmem:[%s1 + $0x24] sm:$0xf]
  %v44 = vld [vmem:[%s1 + $0x28] sm:$0xf]
  %v45 = vld [vmem:[%s1 + $0x2c] sm:$0xf]
  %v46 = vld [vmem:[%s1 + $0x30] sm:$0xf]
  %v47 = vld [vmem:[%s1 + $0x34] sm:$0xf]
  %v48 = vld [vmem:[%s1 + $0x38] sm:$0xf]
  %v49 = vld [vmem:[%s1 + $0x3c] sm:$0xf]
  %v50 = vld [vmem:[%s1 + $0x40] sm:$0xf]
  %v51 = vld [vmem:[%s1 + $0x44] sm:$0xf]
  %v52 = vld [vmem:[%s1 + $0x48] sm:$0x3]
  %v69 = vunpack.c.l.b16 %v18
  %v70 = vunpack.c.h.b16 %v18
  %v71 = vunpack.c.l.b16 %v19
  %v72 = vunpack.c.h.b16 %v19
  %v73 = vunpack.c.l.b16 %v20
  %v74 = vunpack.c.h.b16 %v20
  %v75 = vunpack.c.l.b16 %v21
  %v76 = vunpack.c.h.b16 %v21
  %v77 = vunpack.c.l.b16 %v22
  %v78 = vunpack.c.h.b16 %v22
  %v79 = vunpack.c.l.b16 %v23
  %v80 = vunpack.c.h.b16 %v23
  %v81 = vunpack.c.l.b16 %v24
  %v82 = vunpack.c.h.b16 %v24
  %v83 = vunpack.c.l.b16 %v25
  %v84 = vunpack.c.h.b16 %v25
  %v85 = vunpack.c.l.b16 %v26
  %v86 = vunpack.c.h.b16 %v26
  %v87 = vunpack.c.l.b16 %v27
  %v88 = vunpack.c.h.b16 %v27
  %v89 = vunpack.c.l.b16 %v28
  %v90 = vunpack.c.h.b16 %v28
  %v91 = vunpack.c.l.b16 %v29
  %v92 = vunpack.c.h.b16 %v29
  %v93 = vunpack.c.l.b16 %v30
  %v94 = vunpack.c.h.b16 %v30
  %v95 = vunpack.c.l.b16 %v31
  %v96 = vunpack.c.h.b16 %v31
  %v97 = vunpack.c.l.b16 %v32
  %v98 = vunpack.c.h.b16 %v32
  %v99 = vunpack.c.l.b16 %v33
  %v100 = vunpack.c.h.b16 %v33
  %v101 = vpack.c.b16 %v71, %v69
  %v102 = vpack.c.b16 %v72, %v70
  %v103 = vpack.c.b16 %v75, %v73
  %v104 = vpack.c.b16 %v76, %v74
  %v105 = vpack.c.b16 %v79, %v77
  %v106 = vpack.c.b16 %v80, %v78
  %v107 = vpack.c.b16 %v83, %v81
  %v108 = vpack.c.b16 %v84, %v82
  %v109 = vpack.c.b16 %v87, %v85
  %v110 = vpack.c.b16 %v88, %v86
  %v111 = vpack.c.b16 %v91, %v89
  %v112 = vpack.c.b16 %v92, %v90
  %v113 = vpack.c.b16 %v95, %v93
  %v114 = vpack.c.b16 %v96, %v94
  %v115 = vpack.c.b16 %v99, %v97
  %v116 = vpack.c.b16 %v100, %v98
  %v144 = vunpack.c.l.b16 %v34
  %v145 = vunpack.c.l.b16 %v35
  %v146 = vunpack.c.l.b16 %v36
  %v147 = vunpack.c.l.b16 %v37
  %v148 = vunpack.c.l.b16 %v38
  %v149 = vunpack.c.l.b16 %v39
  %v150 = vunpack.c.l.b16 %v40
  %v151 = vunpack.c.l.b16 %v41
  %v152 = vunpack.c.l.b16 %v42
  %v153 = vunpack.c.l.b16 %v43
  %v154 = vunpack.c.l.b16 %v44
  %v155 = vunpack.c.l.b16 %v45
  %v156 = vunpack.c.l.b16 %v46
  %v157 = vunpack.c.l.b16 %v47
  %v158 = vunpack.c.l.b16 %v48
  %v159 = vunpack.c.l.b16 %v49
  %v160 = vunpack.c.l.b16 %v50
  %v161 = vunpack.c.l.b16 %v51
  %v162 = vunpack.c.l.b16 %v52
  %v163 = vpack.c.b16 %v145, %v144
  %v164 = vpack.c.b16 %v147, %v146
  %v165 = vpack.c.b16 %v149, %v148
  %v166 = vpack.c.b16 %v151, %v150
  %v167 = vpack.c.b16 %v153, %v152
  %v168 = vpack.c.b16 %v155, %v154
  %v169 = vpack.c.b16 %v157, %v156
  %v170 = vpack.c.b16 %v159, %v158
  %v171 = vpack.c.b16 %v161, %v160
  %v172 = vpack.c.b16 %v162, %v162
  %vm182 = vcmask 154624
  %v184 = vsel %vm182, %v102, 0
  %v187 = vsel %vm182, %v104, 0
  %v190 = vsel %vm182, %v106, 0
  %v193 = vsel %vm182, %v108, 0
  %v196 = vsel %vm182, %v110, 0
  %v199 = vsel %vm182, %v112, 0
  %v202 = vsel %vm182, %v114, 0
  %v205 = vsel %vm182, %v116, 0
  %vm207 = vcmask 1040384
  %vm208 = vcmask 1041408
  %v209 = vsel %vm207, 4294967295, 65535
  %v210 = vsel %vm208, %v209, 0
  %v212 = vand.u32 %v172, %v210
  %214 = vmatpush.bf16.msra.mxu0 %v170
  %215 = vmatpush.bf16.msra.mxu0 %v169
  %216 = vmatpush.bf16.msra.mxu0 %v168
  %217 = vmatpush.bf16.msra.mxu0 %v167
  %218 = vmatpush.bf16.msra.mxu0 %v166
  %219 = vmatpush.bf16.msra.mxu0 %v165
  %220 = vmatpush.bf16.msra.mxu0 %v164
  %221 = vmatpush.bf16.msra.mxu0 %v163
  %222 = vmatmul.bf16.gmra.mxu0 %v101
  %v223 = vpop.f32.mrf.mxu0
  %v224 = vadd.f32 0.0, %v223
  %v225 = vpop.f32.mrf.mxu0
  %v226 = vadd.f32 0.0, %v225
  %227 = vmatmul.bf16.gmra.mxu0 %v103
  %v228 = vpop.f32.mrf.mxu0
  %v229 = vadd.f32 0.0, %v228
  %v230 = vpop.f32.mrf.mxu0
  %v231 = vadd.f32 0.0, %v230
  %232 = vmatmul.bf16.gmra.mxu0 %v105
  %v233 = vpop.f32.mrf.mxu0
  %v234 = vadd.f32 0.0, %v233
  %v235 = vpop.f32.mrf.mxu0
  %v236 = vadd.f32 0.0, %v235
  %237 = vmatmul.bf16.gmra.mxu0 %v107
  %v238 = vpop.f32.mrf.mxu0
  %v239 = vadd.f32 0.0, %v238
  %v240 = vpop.f32.mrf.mxu0
  %v241 = vadd.f32 0.0, %v240
  %242 = vmatmul.bf16.gmra.mxu0 %v109
  %v243 = vpop.f32.mrf.mxu0
  %v244 = vadd.f32 0.0, %v243
  %v245 = vpop.f32.mrf.mxu0
  %v246 = vadd.f32 0.0, %v245
  %247 = vmatmul.bf16.gmra.mxu0 %v111
  %v248 = vpop.f32.mrf.mxu0
  %v249 = vadd.f32 0.0, %v248
  %v250 = vpop.f32.mrf.mxu0
  %v251 = vadd.f32 0.0, %v250
  %252 = vmatmul.bf16.gmra.mxu0 %v113
  %v253 = vpop.f32.mrf.mxu0
  %v254 = vadd.f32 0.0, %v253
  %v255 = vpop.f32.mrf.mxu0
  %v256 = vadd.f32 0.0, %v255
  %257 = vmatmul.bf16.gmra.mxu0 %v115
  %v258 = vpop.f32.mrf.mxu0
  %v259 = vadd.f32 0.0, %v258
  %v260 = vpop.f32.mrf.mxu0
  %v261 = vadd.f32 0.0, %v260
  %262 = vdwg.mxu0
  %263 = vmatpush.bf16.msra.mxu0 0
  %264 = vmatpush.bf16.msra.mxu0 0
  %265 = vmatpush.bf16.msra.mxu0 0
  %266 = vmatpush.bf16.msra.mxu0 0
  %267 = vmatpush.bf16.msra.mxu0 0
  %268 = vmatpush.bf16.msra.mxu0 0
  %269 = vmatpush.bf16.msra.mxu0 %v212
  %270 = vmatpush.bf16.msra.mxu0 %v171
  %271 = vmatmul.bf16.gmra.mxu0 %v184
  %v272 = vpop.f32.mrf.mxu0
  %v273 = vadd.f32 %v224, %v272
  %v274 = vpop.f32.mrf.mxu0
  %v275 = vadd.f32 %v226, %v274
  %276 = vmatmul.bf16.gmra.mxu0 %v187
  %v277 = vpop.f32.mrf.mxu0
  %v278 = vadd.f32 %v229, %v277
  %v279 = vpop.f32.mrf.mxu0
  %v280 = vadd.f32 %v231, %v279
  %281 = vmatmul.bf16.gmra.mxu0 %v190
  %v282 = vpop.f32.mrf.mxu0
  %v283 = vadd.f32 %v234, %v282
  %v284 = vpop.f32.mrf.mxu0
  %v285 = vadd.f32 %v236, %v284
  %286 = vmatmul.bf16.gmra.mxu0 %v193
  %v287 = vpop.f32.mrf.mxu0
  %v288 = vadd.f32 %v239, %v287
  %v289 = vpop.f32.mrf.mxu0
  %v290 = vadd.f32 %v241, %v289
  %291 = vmatmul.bf16.gmra.mxu0 %v196
  %v292 = vpop.f32.mrf.mxu0
  %v293 = vadd.f32 %v244, %v292
  %v294 = vpop.f32.mrf.mxu0
  %v295 = vadd.f32 %v246, %v294
  %296 = vmatmul.bf16.gmra.mxu0 %v199
  %v297 = vpop.f32.mrf.mxu0
  %v298 = vadd.f32 %v249, %v297
  %v299 = vpop.f32.mrf.mxu0
  %v300 = vadd.f32 %v251, %v299
  %301 = vmatmul.bf16.gmra.mxu0 %v202
  %v302 = vpop.f32.mrf.mxu0
  %v303 = vadd.f32 %v254, %v302
  %v304 = vpop.f32.mrf.mxu0
  %v305 = vadd.f32 %v256, %v304
  %306 = vmatmul.bf16.gmra.mxu0 %v205
  %v307 = vpop.f32.mrf.mxu0
  %v308 = vadd.f32 %v259, %v307
  %v309 = vpop.f32.mrf.mxu0
  %v310 = vadd.f32 %v261, %v309
  %311 = vdwg.mxu0
  %vm312 = vcmask 523264
  %v313 = vsel %vm312, %v273, 0.0
  %v314 = vsel %vm312, %v275, 0.0
  %v315 = vadd.f32 %v313, %v314
  %v316 = vsel %vm312, %v278, 0.0
  %v317 = vadd.f32 %v315, %v316
  %v318 = vsel %vm312, %v280, 0.0
  %v319 = vadd.f32 %v317, %v318
  %v320 = vsel %vm312, %v283, 0.0
  %v321 = vadd.f32 %v319, %v320
  %v322 = vsel %vm312, %v285, 0.0
  %v323 = vadd.f32 %v321, %v322
  %v324 = vsel %vm312, %v288, 0.0
  %v325 = vadd.f32 %v323, %v324
  %v326 = vsel %vm312, %v290, 0.0
  %v327 = vadd.f32 %v325, %v326
  %v328 = vsel %vm312, %v293, 0.0
  %v329 = vadd.f32 %v327, %v328
  %v330 = vsel %vm312, %v295, 0.0
  %v331 = vadd.f32 %v329, %v330
  %v332 = vsel %vm312, %v298, 0.0
  %v333 = vadd.f32 %v331, %v332
  %v334 = vsel %vm312, %v300, 0.0
  %v335 = vadd.f32 %v333, %v334
  %v336 = vsel %vm312, %v303, 0.0
  %v337 = vadd.f32 %v335, %v336
  %v338 = vsel %vm312, %v305, 0.0
  %v339 = vadd.f32 %v337, %v338
  %v340 = vsel %vm312, %v308, 0.0
  %v341 = vadd.f32 %v339, %v340
  %v342 = vsel %vm312, %v310, 0.0
  %v343 = vadd.f32 %v341, %v342
  %v344 = vrot.slane %v343, 4
  %v345 = vadd.f32 %v343, %v344
  %v346 = vrot.slane %v345, 2
  %v347 = vadd.f32 %v345, %v346
  %v348 = vrot.slane %v347, 1
  %v349 = vadd.f32 %v347, %v348
  %v350 = vmul.f32 %v349, 0.0078125
  %v351 = vsub.f32 %v273, %v350
  %v352 = vsub.f32 %v275, %v350
  %v353 = vsub.f32 %v278, %v350
  %v354 = vsub.f32 %v280, %v350
  %v355 = vsub.f32 %v283, %v350
  %v356 = vsub.f32 %v285, %v350
  %v357 = vsub.f32 %v288, %v350
  %v358 = vsub.f32 %v290, %v350
  %v359 = vsub.f32 %v293, %v350
  %v360 = vsub.f32 %v295, %v350
  %v361 = vsub.f32 %v298, %v350
  %v362 = vsub.f32 %v300, %v350
  %v363 = vsub.f32 %v303, %v350
  %v364 = vsub.f32 %v305, %v350
  %v365 = vsub.f32 %v308, %v350
  %v366 = vsub.f32 %v310, %v350
  %v367 = vmul.f32 %v351, %v351
  %v368 = vmul.f32 %v352, %v352
  %v369 = vmul.f32 %v353, %v353
  %v370 = vmul.f32 %v354, %v354
  %v371 = vmul.f32 %v355, %v355
  %v372 = vmul.f32 %v356, %v356
  %v373 = vmul.f32 %v357, %v357
  %v374 = vmul.f32 %v358, %v358
  %v375 = vmul.f32 %v359, %v359
  %v376 = vmul.f32 %v360, %v360
  %v377 = vmul.f32 %v361, %v361
  %v378 = vmul.f32 %v362, %v362
  %v379 = vmul.f32 %v363, %v363
  %v380 = vmul.f32 %v364, %v364
  %v381 = vmul.f32 %v365, %v365
  %v382 = vmul.f32 %v366, %v366
  %v383 = vsel %vm312, %v367, 0.0
  %v384 = vsel %vm312, %v368, 0.0
  %v385 = vadd.f32 %v383, %v384
  %v386 = vsel %vm312, %v369, 0.0
  %v387 = vadd.f32 %v385, %v386
  %v388 = vsel %vm312, %v370, 0.0
  %v389 = vadd.f32 %v387, %v388
  %v390 = vsel %vm312, %v371, 0.0
  %v391 = vadd.f32 %v389, %v390
  %v392 = vsel %vm312, %v372, 0.0
  %v393 = vadd.f32 %v391, %v392
  %v394 = vsel %vm312, %v373, 0.0
  %v395 = vadd.f32 %v393, %v394
  %v396 = vsel %vm312, %v374, 0.0
  %v397 = vadd.f32 %v395, %v396
  %v398 = vsel %vm312, %v375, 0.0
  %v399 = vadd.f32 %v397, %v398
  %v400 = vsel %vm312, %v376, 0.0
  %v401 = vadd.f32 %v399, %v400
  %v402 = vsel %vm312, %v377, 0.0
  %v403 = vadd.f32 %v401, %v402
  %v404 = vsel %vm312, %v378, 0.0
  %v405 = vadd.f32 %v403, %v404
  %v406 = vsel %vm312, %v379, 0.0
  %v407 = vadd.f32 %v405, %v406
  %v408 = vsel %vm312, %v380, 0.0
  %v409 = vadd.f32 %v407, %v408
  %v410 = vsel %vm312, %v381, 0.0
  %v411 = vadd.f32 %v409, %v410
  %v412 = vsel %vm312, %v382, 0.0
  %v413 = vadd.f32 %v411, %v412
  %v414 = vrot.slane %v413, 4
  %v415 = vadd.f32 %v413, %v414
  %v416 = vrot.slane %v415, 2
  %v417 = vadd.f32 %v415, %v416
  %v418 = vrot.slane %v417, 1
  %v419 = vadd.f32 %v417, %v418
  %v420 = vmul.f32 %v419, 0.0078125
  %v421 = vld [vmem:[%s2] sm:$0x1]
  %v422 = vadd.f32 %v420, 1e-05
  %v423 = vrsqrt.pop %v422
  %v424 = vmul.f32 %v423, %v422
  %v425 = vmul.f32 %v424, %v423
  %v426 = vmul.f32 0.5, %v425
  %v427 = vsub.f32 1.5, %v426
  %v428 = vmul.f32 %v423, %v427
  %vm429 = vweird.f32 %v422
  %vm430 = vweird.f32 %v423
  %vm431 = vmor %vm429, %vm430
  %v432 = vsel %vm431, %v423, %v428
  %v433 = vmul.f32 %v421, %v432
  %v435 = vperm.slane %v433, 0
  %v437 = vmul.f32 %v351, %v435
  %v438 = vmul.f32 %v352, %v435
  %v439 = vmul.f32 %v353, %v435
  %v440 = vmul.f32 %v354, %v435
  %v441 = vmul.f32 %v355, %v435
  %v442 = vmul.f32 %v356, %v435
  %v443 = vmul.f32 %v357, %v435
  %v444 = vmul.f32 %v358, %v435
  %v445 = vmul.f32 %v359, %v435
  %v446 = vmul.f32 %v360, %v435
  %v447 = vmul.f32 %v361, %v435
  %v448 = vmul.f32 %v362, %v435
  %v449 = vmul.f32 %v363, %v435
  %v450 = vmul.f32 %v364, %v435
  %v451 = vmul.f32 %v365, %v435
  %v452 = vmul.f32 %v366, %v435
  %v453 = vld [vmem:[%s3] sm:$0x1]
  %v455 = vperm.slane %v453, 0
  %v457 = vadd.f32 %v437, %v455
  %v458 = vadd.f32 %v438, %v455
  %v459 = vadd.f32 %v439, %v455
  %v460 = vadd.f32 %v440, %v455
  %v461 = vadd.f32 %v441, %v455
  %v462 = vadd.f32 %v442, %v455
  %v463 = vadd.f32 %v443, %v455
  %v464 = vadd.f32 %v444, %v455
  %v465 = vadd.f32 %v445, %v455
  %v466 = vadd.f32 %v446, %v455
  %v467 = vadd.f32 %v447, %v455
  %v468 = vadd.f32 %v448, %v455
  %v469 = vadd.f32 %v449, %v455
  %v470 = vadd.f32 %v450, %v455
  %v471 = vadd.f32 %v451, %v455
  %v472 = vadd.f32 %v452, %v455
  %v473 = vmax.f32 %v457, 0.0
  %v474 = vmax.f32 %v458, 0.0
  %v475 = vmax.f32 %v459, 0.0
  %v476 = vmax.f32 %v460, 0.0
  %v477 = vmax.f32 %v461, 0.0
  %v478 = vmax.f32 %v462, 0.0
  %v479 = vmax.f32 %v463, 0.0
  %v480 = vmax.f32 %v464, 0.0
  %v481 = vmax.f32 %v465, 0.0
  %v482 = vmax.f32 %v466, 0.0
  %v483 = vmax.f32 %v467, 0.0
  %v484 = vmax.f32 %v468, 0.0
  %v485 = vmax.f32 %v469, 0.0
  %v486 = vmax.f32 %v470, 0.0
  %v487 = vmax.f32 %v471, 0.0
  %v488 = vmax.f32 %v472, 0.0
  %v489 = vpack.c.bf16 %v473, %v473
  %v490 = vpack.c.bf16 %v474, %v474
  %v491 = vpack.c.bf16 %v475, %v475
  %v492 = vpack.c.bf16 %v476, %v476
  %v493 = vpack.c.bf16 %v477, %v477
  %v494 = vpack.c.bf16 %v478, %v478
  %v495 = vpack.c.bf16 %v479, %v479
  %v496 = vpack.c.bf16 %v480, %v480
  %v497 = vpack.c.bf16 %v481, %v481
  %v498 = vpack.c.bf16 %v482, %v482
  %v499 = vpack.c.bf16 %v483, %v483
  %v500 = vpack.c.bf16 %v484, %v484
  %v501 = vpack.c.bf16 %v485, %v485
  %v502 = vpack.c.bf16 %v486, %v486
  %v503 = vpack.c.bf16 %v487, %v487
  %v504 = vpack.c.bf16 %v488, %v488
  %vm505 = vcmask 519168
  %506 = vst.msk [vmem:[%s4] sm:$0xf] %vm505, %v489
  %507 = vst.msk [vmem:[%s4 + $0x4] sm:$0xf] %vm505, %v490
  %508 = vst.msk [vmem:[%s4 + $0x8] sm:$0xf] %vm505, %v491
  %509 = vst.msk [vmem:[%s4 + $0xc] sm:$0xf] %vm505, %v492
  %510 = vst.msk [vmem:[%s4 + $0x10] sm:$0xf] %vm505, %v493
  %511 = vst.msk [vmem:[%s4 + $0x14] sm:$0xf] %vm505, %v494
  %512 = vst.msk [vmem:[%s4 + $0x18] sm:$0xf] %vm505, %v495
  %513 = vst.msk [vmem:[%s4 + $0x1c] sm:$0xf] %vm505, %v496
  %514 = vst.msk [vmem:[%s4 + $0x20] sm:$0xf] %vm505, %v497
  %515 = vst.msk [vmem:[%s4 + $0x24] sm:$0xf] %vm505, %v498
  %516 = vst.msk [vmem:[%s4 + $0x28] sm:$0xf] %vm505, %v499
  %517 = vst.msk [vmem:[%s4 + $0x2c] sm:$0xf] %vm505, %v500
  %518 = vst.msk [vmem:[%s4 + $0x30] sm:$0xf] %vm505, %v501
  %519 = vst.msk [vmem:[%s4 + $0x34] sm:$0xf] %vm505, %v502
  %520 = vst.msk [vmem:[%s4 + $0x38] sm:$0xf] %vm505, %v503
  %521 = vst.msk [vmem:[%s4 + $0x3c] sm:$0xf] %vm505, %v504
  // Predicated region
  $region18: #{tpu_custom_call.1} parent=0 // pred_check
    _
  $region19: #{tpu_custom_call.1} parent=0 // pred_check_branch
    %523 = sbr.rel (0) target = $region21
  $region20: #{tpu_custom_call.1} parent=0 // pred_region
    _
  $region21: #{tpu_custom_call.1} parent=0 // pred_fallthru
    _
  // Predicated region
  $region22: #{tpu_custom_call.1} parent=0 // pred_check
    _
  $region23: #{tpu_custom_call.1} parent=0 // pred_check_branch
    %525 = sbr.rel (0) target = $region25
  $region24: #{tpu_custom_call.1} parent=0 // pred_region
    _
  $region25: #{tpu_custom_call.1} parent=0 // pred_fallthru
    _

</llo_original>
